<compile_context>
chip_gen: v7x
topology: tpu7x:2x2x1
jax: 0.10.0
libtpu: 0.0.40
codegen_flags: <defaults>
</compile_context>

<pallas_src>
import jax
import jax.numpy as jnp
from jax.experimental import pallas as pl
from jax.experimental.pallas import tpu as pltpu


def _attn_step(x_ref, wqkv_ref, bqkv_ref, wo_ref, bo_ref, out_ref, acc_ref, aw_ref):
    """One (batch, head) grid step. All matmuls are dense 2-D bf16 MXU ops."""
    h = pl.program_id(1)

    @pl.when(h == 0)
    def _():
        # Fold the out_proj bias into the accumulator init (saves a final add).
        acc_ref[...] = jnp.broadcast_to(bo_ref[...], acc_ref.shape)

    xb = x_ref[0].astype(jnp.bfloat16)                                   # (T, E)

    # Per-head q/k/v projections from the packed weight slab (one DMA per step).
    # Scaling is already folded into the q slice on the host.
    q = jnp.dot(xb, wqkv_ref[0, 0], preferred_element_type=jnp.float32) + bqkv_ref[0, 0]
    k = jnp.dot(xb, wqkv_ref[0, 1], preferred_element_type=jnp.float32) + bqkv_ref[0, 1]
    v = jnp.dot(xb, wqkv_ref[0, 2], preferred_element_type=jnp.float32) + bqkv_ref[0, 2]

    # Scores + numerically-stable softmax over src axis (matches F.softmax(-1)).
    s = jax.lax.dot_general(q.astype(jnp.bfloat16), k.astype(jnp.bfloat16),
                            (((1,), (1,)), ((), ())),
                            preferred_element_type=jnp.float32)          # (T, S)
    s = s - jnp.max(s, axis=-1, keepdims=True)
    e = jnp.exp(s)
    p = e * pl.reciprocal(jnp.sum(e, axis=-1, keepdims=True), approx=False)

    if aw_ref is not None:
        aw_ref[0, 0] = p                                                 # (T, S)

    # probs @ V, then this head's slice of out_proj; accumulate over heads.
    o = jnp.dot(p.astype(jnp.bfloat16), v.astype(jnp.bfloat16),
                preferred_element_type=jnp.float32)                      # (T, d)
    acc_ref[...] += jnp.dot(o.astype(jnp.bfloat16), wo_ref[0],
                            preferred_element_type=jnp.float32)          # (T, E)

    @pl.when(h == pl.num_programs(1) - 1)
    def _():
        out_ref[0] = acc_ref[...]


def _attn_kernel_w(x, wqkv, bqkv, wo, bo, out_ref, aw_ref, acc_ref):
    _attn_step(x, wqkv, bqkv, wo, bo, out_ref, acc_ref, aw_ref)


def _attn_kernel_nw(x, wqkv, bqkv, wo, bo, out_ref, acc_ref):
    _attn_step(x, wqkv, bqkv, wo, bo, out_ref, acc_ref, None)


def self_attention_pallas(query, params, num_heads, need_weights=True):
    """query: (tgt_len, bsz, embed_dim) f32.  Returns (attn_output, attn_weights)."""
    T, B, E = query.shape
    H = num_heads
    d = E // H
    assert d * H == E
    scaling = float(d) ** -0.5

    # --- host-side (one-time) parameter prep -------------------------------
    # PyTorch Linear stores (out, in); y = x @ W.T + b.  Split the output dim
    # into heads so the kernel never lane-slices, fold q scaling, pack q/k/v
    # into a single per-head slab, cast weights to bf16.
    def split_heads_out(w):                       # (E_out, E_in) -> (H, E_in, d)
        return jnp.transpose(w.T.reshape(E, H, d), (1, 0, 2))

    wq = split_heads_out(params["q_w"] * scaling)
    wk = split_heads_out(params["k_w"])
    wv = split_heads_out(params["v_w"])
    w_qkv = jnp.stack([wq, wk, wv], axis=1).astype(jnp.bfloat16)      # (H, 3, E, d)
    b_qkv = jnp.stack([(params["q_b"] * scaling).reshape(H, 1, d),
                       params["k_b"].reshape(H, 1, d),
                       params["v_b"].reshape(H, 1, d)],
                      axis=1).astype(jnp.float32)                     # (H, 3, 1, d)
    wo = params["o_w"].T.reshape(H, d, E).astype(jnp.bfloat16)        # (H, d, E)
    bo = params["o_b"].reshape(1, E).astype(jnp.float32)

    x = jnp.transpose(query, (1, 0, 2))           # (B, T, E)

    # --- specs --------------------------------------------------------------
    x_spec    = pl.BlockSpec((1, T, E),    lambda b, h: (b, 0, 0))       # fetched once per b
    wqkv_spec = pl.BlockSpec((1, 3, E, d), lambda b, h: (h, 0, 0, 0))    # per-head packed q/k/v W
    bqkv_spec = pl.BlockSpec((1, 3, 1, d), lambda b, h: (h, 0, 0, 0))    # per-head packed q/k/v b
    wo_spec   = pl.BlockSpec((1, d, E),    lambda b, h: (h, 0, 0))       # per-head out-proj slice
    bo_spec   = pl.BlockSpec((1, E),       lambda b, h: (0, 0))
    out_spec  = pl.BlockSpec((1, T, E),    lambda b, h: (b, 0, 0))       # resident across h

    in_specs = [x_spec, wqkv_spec, bqkv_spec, wo_spec, bo_spec]
    scratch = [pltpu.VMEM((T, E), jnp.float32)]                          # f32 out accumulator
    cparams = pltpu.CompilerParams(
        dimension_semantics=("parallel", "arbitrary"))
    args = (x, w_qkv, b_qkv, wo, bo)

    if need_weights:
        out, attn_w = pl.pallas_call(
            _attn_kernel_w,
            out_shape=(jax.ShapeDtypeStruct((B, T, E), jnp.float32),
                       jax.ShapeDtypeStruct((B, H, T, T), jnp.float32)),
            grid=(B, H),
            in_specs=in_specs,
            out_specs=(out_spec,
                       pl.BlockSpec((1, 1, T, T), lambda b, h: (b, h, 0, 0))),
            scratch_shapes=scratch,
            compiler_params=cparams,
        )(*args)
    else:
        out = pl.pallas_call(
            _attn_kernel_nw,
            out_shape=jax.ShapeDtypeStruct((B, T, E), jnp.float32),
            grid=(B, H),
            in_specs=in_specs,
            out_specs=out_spec,
            scratch_shapes=scratch,
            compiler_params=cparams,
        )(*args)
        attn_w = None

    attn_output = jnp.transpose(out, (1, 0, 2))   # back to (T, B, E)
    return attn_output, attn_w


def self_attention_ref(query, params, num_heads):
    """Pure-JAX f32 reference mirroring the PyTorch forward (no masks/cache)."""
    T, B, E = query.shape
    d = E // num_heads
    scaling = float(d) ** -0.5

    def linear(x, w, b):
        return jnp.einsum("tbe,oe->tbo", x, w) + b

    q = linear(query, params["q_w"], params["q_b"]) * scaling
    k = linear(query, params["k_w"], params["k_b"])
    v = linear(query, params["v_w"], params["v_b"])

    def shape(t):  # (T, B, E) -> (B*H, T, d)
        return jnp.transpose(t.reshape(T, B * num_heads, d), (1, 0, 2))

    q, k, v = shape(q), shape(k), shape(v)
    scores = jnp.einsum("btd,bsd->bts", q, k)
    probs = jax.nn.softmax(scores, axis=-1)
    out = jnp.einsum("bts,bsd->btd", probs, v)                  # (B*H, T, d)
    out = jnp.transpose(out, (1, 0, 2)).reshape(T, B, E)
    out = jnp.einsum("tbe,oe->tbo", out, params["o_w"]) + params["o_b"]
    attn_w = probs.reshape(B, num_heads, T, T)
    return out, attn_w


if __name__ == "__main__":
    # Small shapes: seq=8, batch=2, hidden=32, heads=4 (head_dim=8)
    tgt_len, bsz, embed_dim, num_heads = 8, 2, 32, 4

    key = jax.random.PRNGKey(0)
    keys = jax.random.split(key, 9)
    scale = 0.02
    params = {
        "q_w": scale * jax.random.normal(keys[0], (embed_dim, embed_dim), jnp.float32),
        "q_b": scale * jax.random.normal(keys[1], (embed_dim,), jnp.float32),
        "k_w": scale * jax.random.normal(keys[2], (embed_dim, embed_dim), jnp.float32),
        "k_b": scale * jax.random.normal(keys[3], (embed_dim,), jnp.float32),
        "v_w": scale * jax.random.normal(keys[4], (embed_dim, embed_dim), jnp.float32),
        "v_b": scale * jax.random.normal(keys[5], (embed_dim,), jnp.float32),
        "o_w": scale * jax.random.normal(keys[6], (embed_dim, embed_dim), jnp.float32),
        "o_b": scale * jax.random.normal(keys[7], (embed_dim,), jnp.float32),
    }
    query = jax.random.normal(keys[8], (tgt_len, bsz, embed_dim), jnp.float32)

    attn_out, attn_w = self_attention_pallas(query, params, num_heads)
    attn_out = jax.block_until_ready(attn_out)
    attn_w = jax.block_until_ready(attn_w)

    ref_out, ref_w = self_attention_ref(query, params, num_heads)
    assert attn_out.shape == (tgt_len, bsz, embed_dim)
    assert attn_w.shape == (bsz, num_heads, tgt_len, tgt_len)
    # bf16 MXU operands (f32 accumulate) -> loosened tolerance vs f32 reference.
    assert jnp.allclose(attn_out, ref_out, atol=2e-2, rtol=2e-2)
    assert jnp.allclose(attn_w, ref_w, atol=2e-2, rtol=2e-2)

    # Also exercise the weights-free (flash-shaped) path.
    out_nw, w_nw = self_attention_pallas(query, params, num_heads, need_weights=False)
    out_nw = jax.block_until_ready(out_nw)
    assert w_nw is None
    assert jnp.allclose(out_nw, attn_out, atol=1e-6, rtol=1e-6)

    print("KERNEL_OK")
</pallas_src>

<mosaic_0001>
module attributes {stable_mosaic.version = 11 : i64} {
  func.func @_attn_kernel_w(%arg0: i32, %arg1: i32, %arg2: memref<1x8x32xf32, #tpu.memory_space<vmem>>, %arg3: memref<1x3x32x8xbf16, #tpu.memory_space<vmem>>, %arg4: memref<1x3x1x8xf32, #tpu.memory_space<vmem>>, %arg5: memref<1x8x32xbf16, #tpu.memory_space<vmem>>, %arg6: memref<1x32xf32, #tpu.memory_space<vmem>>, %arg7: memref<1x8x32xf32, #tpu.memory_space<vmem>>, %arg8: memref<1x1x8x8xf32, #tpu.memory_space<vmem>>, %arg9: memref<8x32xf32, #tpu.memory_space<vmem>>) attributes {dimension_semantics = [#tpu.dimension_semantics<parallel>, #tpu.dimension_semantics<arbitrary>], iteration_bounds = array<i64: 2, 4>, scalar_prefetch = 0 : i64, scratch_operands = 1 : i64, tpu.core_type = #tpu.core_type<tc>, window_params = [{transform_indices = @transform_0, window_bounds = array<i64: 1, 8, 32>}, {transform_indices = @transform_1, window_bounds = array<i64: 1, 3, 32, 8>}, {transform_indices = @transform_2, window_bounds = array<i64: 1, 3, 1, 8>}, {transform_indices = @transform_3, window_bounds = array<i64: 1, 8, 32>}, {pipeline_mode = #tpu.pipeline_mode<synchronous>, transform_indices = @transform_4, window_bounds = array<i64: 1, 32>}, {transform_indices = @transform_5, window_bounds = array<i64: 1, 8, 32>}, {transform_indices = @transform_6, window_bounds = array<i64: 1, 1, 8, 8>}]} {
    %c0_i32 = arith.constant 0 : i32
    %0 = arith.cmpi eq, %arg1, %c0_i32 : i32
    %1 = arith.extui %0 : i1 to i32
    %c0_i32_0 = arith.constant 0 : i32
    %2 = arith.cmpi ne, %1, %c0_i32_0 : i32
    scf.if %2 {
      %c0_44 = arith.constant 0 : index
      %c0_45 = arith.constant 0 : index
      %56 = vector.load %arg6[%c0_44, %c0_45] : memref<1x32xf32, #tpu.memory_space<vmem>>, vector<1x32xf32>
      %57 = vector.shape_cast %56 : vector<1x32xf32> to vector<1x32xf32>
      %58 = vector.broadcast %57 : vector<1x32xf32> to vector<8x32xf32>
      %c0_46 = arith.constant 0 : index
      %c0_47 = arith.constant 0 : index
      %59 = vector.load %arg9[%c0_46, %c0_47] : memref<8x32xf32, #tpu.memory_space<vmem>>, vector<8x32xf32>
      tpu.vector_store %arg9[%c0_46, %c0_47], %58 {strides = array<i32>} : memref<8x32xf32, #tpu.memory_space<vmem>>, vector<8x32xf32>,
    } else {
    }
    %c0 = arith.constant 0 : index
    %c0_1 = arith.constant 0 : index
    %c0_2 = arith.constant 0 : index
    %3 = vector.load %arg2[%c0, %c0_1, %c0_2] : memref<1x8x32xf32, #tpu.memory_space<vmem>>, vector<1x8x32xf32>
    %4 = vector.shape_cast %3 : vector<1x8x32xf32> to vector<8x32xf32>
    %5 = arith.truncf %4 : vector<8x32xf32> to vector<8x32xbf16>
    %c0_3 = arith.constant 0 : index
    %c0_4 = arith.constant 0 : index
    %c0_5 = arith.constant 0 : index
    %c0_6 = arith.constant 0 : index
    %6 = vector.load %arg3[%c0_3, %c0_4, %c0_5, %c0_6] : memref<1x3x32x8xbf16, #tpu.memory_space<vmem>>, vector<1x1x32x8xbf16>
    %7 = vector.shape_cast %6 : vector<1x1x32x8xbf16> to vector<32x8xbf16>
    %cst = arith.constant dense<0.000000e+00> : vector<8x8xf32>
    %8 = tpu.matmul %5, %7, %cst {dimension_numbers = #tpu.dot_dimension_numbers<[1], [0], [0], [1], [0, 0, 1, 1], [], []>} : vector<8x32xbf16>, vector<32x8xbf16>, vector<8x8xf32> -> vector<8x8xf32>
    %c0_7 = arith.constant 0 : index
    %c0_8 = arith.constant 0 : index
    %c0_9 = arith.constant 0 : index
    %c0_10 = arith.constant 0 : index
    %9 = vector.load %arg4[%c0_7, %c0_8, %c0_9, %c0_10] : memref<1x3x1x8xf32, #tpu.memory_space<vmem>>, vector<1x1x1x8xf32>
    %10 = vector.shape_cast %9 : vector<1x1x1x8xf32> to vector<1x8xf32>
    %11 = vector.broadcast %10 : vector<1x8xf32> to vector<8x8xf32>
    %12 = arith.addf %8, %11 : vector<8x8xf32>
    %c0_11 = arith.constant 0 : index
    %c1 = arith.constant 1 : index
    %c0_12 = arith.constant 0 : index
    %c0_13 = arith.constant 0 : index
    %13 = vector.load %arg3[%c0_11, %c1, %c0_12, %c0_13] : memref<1x3x32x8xbf16, #tpu.memory_space<vmem>>, vector<1x1x32x8xbf16>
    %14 = vector.shape_cast %13 : vector<1x1x32x8xbf16> to vector<32x8xbf16>
    %cst_14 = arith.constant dense<0.000000e+00> : vector<8x8xf32>
    %15 = tpu.matmul %5, %14, %cst_14 {dimension_numbers = #tpu.dot_dimension_numbers<[1], [0], [0], [1], [0, 0, 1, 1], [], []>} : vector<8x32xbf16>, vector<32x8xbf16>, vector<8x8xf32> -> vector<8x8xf32>
    %c0_15 = arith.constant 0 : index
    %c1_16 = arith.constant 1 : index
    %c0_17 = arith.constant 0 : index
    %c0_18 = arith.constant 0 : index
    %16 = vector.load %arg4[%c0_15, %c1_16, %c0_17, %c0_18] : memref<1x3x1x8xf32, #tpu.memory_space<vmem>>, vector<1x1x1x8xf32>
    %17 = vector.shape_cast %16 : vector<1x1x1x8xf32> to vector<1x8xf32>
    %18 = vector.broadcast %17 : vector<1x8xf32> to vector<8x8xf32>
    %19 = arith.addf %15, %18 : vector<8x8xf32>
    %c0_19 = arith.constant 0 : index
    %c2 = arith.constant 2 : index
    %c0_20 = arith.constant 0 : index
    %c0_21 = arith.constant 0 : index
    %20 = vector.load %arg3[%c0_19, %c2, %c0_20, %c0_21] : memref<1x3x32x8xbf16, #tpu.memory_space<vmem>>, vector<1x1x32x8xbf16>
    %21 = vector.shape_cast %20 : vector<1x1x32x8xbf16> to vector<32x8xbf16>
    %cst_22 = arith.constant dense<0.000000e+00> : vector<8x8xf32>
    %22 = tpu.matmul %5, %21, %cst_22 {dimension_numbers = #tpu.dot_dimension_numbers<[1], [0], [0], [1], [0, 0, 1, 1], [], []>} : vector<8x32xbf16>, vector<32x8xbf16>, vector<8x8xf32> -> vector<8x8xf32>
    %c0_23 = arith.constant 0 : index
    %c2_24 = arith.constant 2 : index
    %c0_25 = arith.constant 0 : index
    %c0_26 = arith.constant 0 : index
    %23 = vector.load %arg4[%c0_23, %c2_24, %c0_25, %c0_26] : memref<1x3x1x8xf32, #tpu.memory_space<vmem>>, vector<1x1x1x8xf32>
    %24 = vector.shape_cast %23 : vector<1x1x1x8xf32> to vector<1x8xf32>
    %25 = vector.broadcast %24 : vector<1x8xf32> to vector<8x8xf32>
    %26 = arith.addf %22, %25 : vector<8x8xf32>
    %27 = arith.truncf %12 : vector<8x8xf32> to vector<8x8xbf16>
    %28 = arith.truncf %19 : vector<8x8xf32> to vector<8x8xbf16>
    %cst_27 = arith.constant dense<0.000000e+00> : vector<8x8xf32>
    %29 = tpu.matmul %27, %28, %cst_27 {dimension_numbers = #tpu.dot_dimension_numbers<[1], [1], [0], [0], [0, 0, 1, 0], [], []>} : vector<8x8xbf16>, vector<8x8xbf16>, vector<8x8xf32> -> vector<8x8xf32>
    %cst_28 = arith.constant dense<0xFF800000> : vector<8xf32>
    %30 = vector.multi_reduction <maximumf>, %29, %cst_28 [1] : vector<8x8xf32> to vector<8xf32>
    %31 = vector.shape_cast %30 : vector<8xf32> to vector<8x1xf32>
    %32 = vector.broadcast %31 : vector<8x1xf32> to vector<8x8xf32>
    %33 = arith.subf %29, %32 : vector<8x8xf32>
    %34 = math.exp %33 : vector<8x8xf32>
    %cst_29 = arith.constant dense<0.000000e+00> : vector<8xf32>
    %35 = vector.multi_reduction <add>, %34, %cst_29 [1] : vector<8x8xf32> to vector<8xf32>
    %36 = vector.shape_cast %35 : vector<8xf32> to vector<8x1xf32>
    %37 = tpu.reciprocal %36 : vector<8x1xf32> -> vector<8x1xf32>
    %38 = vector.broadcast %37 : vector<8x1xf32> to vector<8x8xf32>
    %39 = arith.mulf %34, %38 : vector<8x8xf32>
    %c0_30 = arith.constant 0 : index
    %c0_31 = arith.constant 0 : index
    %c0_32 = arith.constant 0 : index
    %c0_33 = arith.constant 0 : index
    %40 = vector.load %arg8[%c0_30, %c0_31, %c0_32, %c0_33] : memref<1x1x8x8xf32, #tpu.memory_space<vmem>>, vector<1x1x8x8xf32>
    %41 = vector.shape_cast %40 : vector<1x1x8x8xf32> to vector<8x8xf32>
    %42 = vector.shape_cast %39 : vector<8x8xf32> to vector<1x1x8x8xf32>
    tpu.vector_store %arg8[%c0_30, %c0_31, %c0_32, %c0_33], %42 {strides = array<i32>} : memref<1x1x8x8xf32, #tpu.memory_space<vmem>>, vector<1x1x8x8xf32>,
    %43 = arith.truncf %39 : vector<8x8xf32> to vector<8x8xbf16>
    %44 = arith.truncf %26 : vector<8x8xf32> to vector<8x8xbf16>
    %cst_34 = arith.constant dense<0.000000e+00> : vector<8x8xf32>
    %45 = tpu.matmul %43, %44, %cst_34 {dimension_numbers = #tpu.dot_dimension_numbers<[1], [0], [0], [1], [0, 0, 1, 1], [], []>} : vector<8x8xbf16>, vector<8x8xbf16>, vector<8x8xf32> -> vector<8x8xf32>
    %c0_35 = arith.constant 0 : index
    %c0_36 = arith.constant 0 : index
    %46 = vector.load %arg9[%c0_35, %c0_36] : memref<8x32xf32, #tpu.memory_space<vmem>>, vector<8x32xf32>
    %47 = arith.truncf %45 : vector<8x8xf32> to vector<8x8xbf16>
    %c0_37 = arith.constant 0 : index
    %c0_38 = arith.constant 0 : index
    %c0_39 = arith.constant 0 : index
    %48 = vector.load %arg5[%c0_37, %c0_38, %c0_39] : memref<1x8x32xbf16, #tpu.memory_space<vmem>>, vector<1x8x32xbf16>
    %49 = vector.shape_cast %48 : vector<1x8x32xbf16> to vector<8x32xbf16>
    %cst_40 = arith.constant dense<0.000000e+00> : vector<8x32xf32>
    %50 = tpu.matmul %47, %49, %cst_40 {dimension_numbers = #tpu.dot_dimension_numbers<[1], [0], [0], [1], [0, 0, 1, 1], [], []>} : vector<8x8xbf16>, vector<8x32xbf16>, vector<8x32xf32> -> vector<8x32xf32>
    %51 = arith.addf %46, %50 : vector<8x32xf32>
    %c0_41 = arith.constant 0 : index
    %c0_42 = arith.constant 0 : index
    %52 = vector.load %arg9[%c0_41, %c0_42] : memref<8x32xf32, #tpu.memory_space<vmem>>, vector<8x32xf32>
    tpu.vector_store %arg9[%c0_41, %c0_42], %51 {strides = array<i32>} : memref<8x32xf32, #tpu.memory_space<vmem>>, vector<8x32xf32>,
    %c3_i32 = arith.constant 3 : i32
    %53 = arith.cmpi eq, %arg1, %c3_i32 : i32
    %54 = arith.extui %53 : i1 to i32
    %c0_i32_43 = arith.constant 0 : i32
    %55 = arith.cmpi ne, %54, %c0_i32_43 : i32
    scf.if %55 {
      %c0_44 = arith.constant 0 : index
      %c0_45 = arith.constant 0 : index
      %56 = vector.load %arg9[%c0_44, %c0_45] : memref<8x32xf32, #tpu.memory_space<vmem>>, vector<8x32xf32>
      %c0_46 = arith.constant 0 : index
      %c0_47 = arith.constant 0 : index
      %c0_48 = arith.constant 0 : index
      %57 = vector.load %arg7[%c0_46, %c0_47, %c0_48] : memref<1x8x32xf32, #tpu.memory_space<vmem>>, vector<1x8x32xf32>
      %58 = vector.shape_cast %57 : vector<1x8x32xf32> to vector<8x32xf32>
      %59 = vector.shape_cast %56 : vector<8x32xf32> to vector<1x8x32xf32>
      tpu.vector_store %arg7[%c0_46, %c0_47, %c0_48], %59 {strides = array<i32>} : memref<1x8x32xf32, #tpu.memory_space<vmem>>, vector<1x8x32xf32>,
    } else {
    }
    return
  }
  func.func @transform_0(%arg0: i32, %arg1: i32) -> (i32, i32, i32) {
    %c0_i32 = arith.constant 0 : i32
    %c0_i32_0 = arith.constant 0 : i32
    %c0_i32_1 = arith.constant 0 : i32
    return %arg0, %c0_i32, %c0_i32_0 : i32, i32, i32
  }
  func.func @transform_1(%arg0: i32, %arg1: i32) -> (i32, i32, i32, i32) {
    %c0_i32 = arith.constant 0 : i32
    %c0_i32_0 = arith.constant 0 : i32
    %c0_i32_1 = arith.constant 0 : i32
    %c0_i32_2 = arith.constant 0 : i32
    return %arg1, %c0_i32, %c0_i32_0, %c0_i32_1 : i32, i32, i32, i32
  }
  func.func @transform_2(%arg0: i32, %arg1: i32) -> (i32, i32, i32, i32) {
    %c0_i32 = arith.constant 0 : i32
    %c0_i32_0 = arith.constant 0 : i32
    %c0_i32_1 = arith.constant 0 : i32
    %c0_i32_2 = arith.constant 0 : i32
    return %arg1, %c0_i32, %c0_i32_0, %c0_i32_1 : i32, i32, i32, i32
  }
  func.func @transform_3(%arg0: i32, %arg1: i32) -> (i32, i32, i32) {
    %c0_i32 = arith.constant 0 : i32
    %c0_i32_0 = arith.constant 0 : i32
    %c0_i32_1 = arith.constant 0 : i32
    return %arg1, %c0_i32, %c0_i32_0 : i32, i32, i32
  }
  func.func @transform_4(%arg0: i32, %arg1: i32) -> (i32, i32) {
    %c0_i32 = arith.constant 0 : i32
    %c0_i32_0 = arith.constant 0 : i32
    %c0_i32_1 = arith.constant 0 : i32
    return %c0_i32, %c0_i32_0 : i32, i32
  }
  func.func @transform_5(%arg0: i32, %arg1: i32) -> (i32, i32, i32) {
    %c0_i32 = arith.constant 0 : i32
    %c0_i32_0 = arith.constant 0 : i32
    %c0_i32_1 = arith.constant 0 : i32
    return %arg0, %c0_i32, %c0_i32_0 : i32, i32, i32
  }
  func.func @transform_6(%arg0: i32, %arg1: i32) -> (i32, i32, i32, i32) {
    %c0_i32 = arith.constant 0 : i32
    %c0_i32_0 = arith.constant 0 : i32
    %c0_i32_1 = arith.constant 0 : i32
    return %arg0, %arg1, %c0_i32, %c0_i32_0 : i32, i32, i32, i32
  }
}

</mosaic_0001>

<llo_original>
// kernel: tpu_custom_call.1
$region0: #{tpu_custom_call.1}
  #allocation0 [shape = 'u32[]', space=smem, size = 0x4, offset = 0x4, fixed_abs, tag = 'smem constant byte address 0x4 - core index']
  #allocation1 [shape = 'u32[144,128]{1,0:T(1,128)}', space=vmem, size = 0x12000, scoped, tag = 'internal scratch']
  #allocation2 [shape = 'f32[8,32]{1,0:T(8,128)}', space=vmem, size = 0x1000, scoped, tag = 'scratch operand']
  %s0 = inlined_call_operand.vmem [shape: f32[2,8,32], index: 0, kind: input, shape index: {}]
  %s1 = inlined_call_operand.vmem [shape: bf16[4,3,32,8], index: 1, kind: input, shape index: {}]
  %s2 = inlined_call_operand.vmem [shape: f32[4,3,1,8], index: 2, kind: input, shape index: {}]
  %s3 = inlined_call_operand.vmem [shape: bf16[4,8,32], index: 3, kind: input, shape index: {}]
  %s4 = inlined_call_operand.vmem [shape: f32[1,32], index: 4, kind: input, shape index: {}]
  %s5 = inlined_call_operand.hbm [shape: f32[2,8,32], index: 5, kind: output, shape index: {0}]
  %s6 = inlined_call_operand.hbm [shape: f32[2,4,8,8], index: 6, kind: output, shape index: {1}]
  %7 = xla_tuple %s5, %s6
  %s8 = sld [smem:[#allocation0]]
  $region69: #{tpu_custom_call.1} parent=0
    _
  %s10 = ssub.s32 1, %s8
  %s11 = scalar_select 0, %s10, %s8
  $region1: #{tpu_custom_call.1} parent=0
    #allocation3 [shape = 'u8[8192]{0}', space=vmem, size = 0x2000, scoped, tag = 'output window, operand 0']
    #allocation4 [shape = 's32[2]{0}', space=sflag, size = 0x8, scoped, tag = 'scoped memory for tpu_custom_call.1']
    #allocation5 [shape = 'u8[8192]{0}', space=vmem, size = 0x2000, scoped, tag = 'output window, operand 1']
    #allocation6 [shape = 's32[2]{0}', space=sflag, size = 0x8, scoped, tag = 'scoped memory for tpu_custom_call.1']
    %12 = vsyncpa [#allocation4], 0
    %s13 = scalar_lea.sflag [#allocation4], 1
    %14 = vsyncpa %s13, 0
    %15 = vsyncpa [#allocation6], 0
    %s16 = scalar_lea.sflag [#allocation6], 1
    %17 = vsyncpa %s16, 0
    loop: start=0, step=1, limit=10
    $region2: #{tpu_custom_call.1} parent=1 // loop_pre_header
      _
    $region3: #{tpu_custom_call.1} parent=1 // loop_header
      %s19 = sphi 0, %s23
      %p20 = scmp.ge.s32.totalorder %s19, 10
      %s26 = sphi 0, %s38
      %s27 = sphi 0, %s34
      %s28 = sphi 0, %s26
      %s29 = sphi 0, %s27
      %s30 = sphi 0, %s28
      %s31 = sphi 0, %s29
      %s41 = sphi 0, %s43
      %s44 = sphi 0, %s41
      %s45 = sphi 0, %s44
      %s61 = sphi 0, %s45
      %s67 = sphi 0, %s69
      %s70 = sphi 0, %s67
      %s71 = sphi 0, %s70
      %s87 = sphi 0, %s71
      %s93 = sphi 0, %s95
      %s96 = sphi 0, %s93
      %s97 = sphi 0, %s96
      %s113 = sphi 0, %s97
      %s119 = sphi 0, %s121
      %s122 = sphi 0, %s119
      %s123 = sphi 0, %s122
      %s139 = sphi 0, %s123
      %s143 = sphi 0, %s143
      %s145 = sphi 0, %s143
      %s146 = sphi 0, %s145
      %s160 = sphi 0, %s146
      %s166 = sphi 0, %s168
      %s169 = sphi 0, %s166
      %s170 = sphi 0, %s169
      %s186 = sphi 0, %s170
      %s194 = sphi 0, %s196
      %s197 = sphi 0, %s194
      %s198 = sphi 0, %s197
      %s214 = sphi 0, %s198
    $region4: #{tpu_custom_call.1} parent=1 // loop_header_branch
      %22 = sbr.rel (%p20) target = $region8
    $region5: #{tpu_custom_call.1} parent=1 // loop_body
      %s24 = ssub.s32 %s19, 1
      %s25 = ssub.s32 %s19, 2
      %s32 = sadd.s32 1, %s27
      %p33 = scmp.ge.s32.totalorder %s32, 4
      %s34 = scalar_select %p33, 0, %s32
      %s35 = sadd.s32 1, %s26
      %s36 = scalar_select %p33, %s35, %s26
      %p37 = scmp.ge.s32.totalorder %s36, 2
      %s38 = scalar_select %p37, 0, %s36
      %s39 = ssub.s32 %s26, %s38
      %p40 = scmp.eq.s32.totalorder %s39, 0
      %s42 = sadd.s32 %s41, 1
      %s43 = scalar_select %p40, %s41, %s42
      %p46 = pneg %p40
      %p47 = scmp.eq.s32.totalorder %s19, 7
      %p48 = por %p46, %p47
      %p49 = scmp.ne.s32.totalorder %s41, %s44
      %p50 = scmp.eq.s32.totalorder %s19, 0
      %p51 = por %p49, %p50
      %p52 = scmp.ne.s32.totalorder %s41, %s44
      %p53 = scmp.eq.s32.totalorder %s24, 7
      %p54 = por %p52, %p53
      %p55 = scmp.ne.s32.totalorder %s44, %s45
      %p56 = scmp.eq.s32.totalorder %s24, 0
      %p57 = por %p55, %p56
      %p58 = scmp.ne.s32.totalorder %s44, %s45
      %p59 = scmp.eq.s32.totalorder %s25, 7
      %p60 = por %p58, %p59
      %p62 = scmp.ne.s32.totalorder %s45, %s61
      %p63 = scmp.eq.s32.totalorder %s25, 0
      %p64 = por %p62, %p63
      %s65 = ssub.s32 %s27, %s34
      %p66 = scmp.eq.s32.totalorder %s65, 0
      %s68 = sadd.s32 %s67, 1
      %s69 = scalar_select %p66, %s67, %s68
      %p72 = pneg %p66
      %p73 = scmp.eq.s32.totalorder %s19, 7
      %p74 = por %p72, %p73
      %p75 = scmp.ne.s32.totalorder %s67, %s70
      %p76 = scmp.eq.s32.totalorder %s19, 0
      %p77 = por %p75, %p76
      %p78 = scmp.ne.s32.totalorder %s67, %s70
      %p79 = scmp.eq.s32.totalorder %s24, 7
      %p80 = por %p78, %p79
      %p81 = scmp.ne.s32.totalorder %s70, %s71
      %p82 = scmp.eq.s32.totalorder %s24, 0
      %p83 = por %p81, %p82
      %p84 = scmp.ne.s32.totalorder %s70, %s71
      %p85 = scmp.eq.s32.totalorder %s25, 7
      %p86 = por %p84, %p85
      %p88 = scmp.ne.s32.totalorder %s71, %s87
      %p89 = scmp.eq.s32.totalorder %s25, 0
      %p90 = por %p88, %p89
      %s91 = ssub.s32 %s27, %s34
      %p92 = scmp.eq.s32.totalorder %s91, 0
      %s94 = sadd.s32 %s93, 1
      %s95 = scalar_select %p92, %s93, %s94
      %p98 = pneg %p92
      %p99 = scmp.eq.s32.totalorder %s19, 7
      %p100 = por %p98, %p99
      %p101 = scmp.ne.s32.totalorder %s93, %s96
      %p102 = scmp.eq.s32.totalorder %s19, 0
      %p103 = por %p101, %p102
      %p104 = scmp.ne.s32.totalorder %s93, %s96
      %p105 = scmp.eq.s32.totalorder %s24, 7
      %p106 = por %p104, %p105
      %p107 = scmp.ne.s32.totalorder %s96, %s97
      %p108 = scmp.eq.s32.totalorder %s24, 0
      %p109 = por %p107, %p108
      %p110 = scmp.ne.s32.totalorder %s96, %s97
      %p111 = scmp.eq.s32.totalorder %s25, 7
      %p112 = por %p110, %p111
      %p114 = scmp.ne.s32.totalorder %s97, %s113
      %p115 = scmp.eq.s32.totalorder %s25, 0
      %p116 = por %p114, %p115
      %s117 = ssub.s32 %s27, %s34
      %p118 = scmp.eq.s32.totalorder %s117, 0
      %s120 = sadd.s32 %s119, 1
      %s121 = scalar_select %p118, %s119, %s120
      %p124 = pneg %p118
      %p125 = scmp.eq.s32.totalorder %s19, 7
      %p126 = por %p124, %p125
      %p127 = scmp.ne.s32.totalorder %s119, %s122
      %p128 = scmp.eq.s32.totalorder %s19, 0
      %p129 = por %p127, %p128
      %p130 = scmp.ne.s32.totalorder %s119, %s122
      %p131 = scmp.eq.s32.totalorder %s24, 7
      %p132 = por %p130, %p131
      %p133 = scmp.ne.s32.totalorder %s122, %s123
      %p134 = scmp.eq.s32.totalorder %s24, 0
      %p135 = por %p133, %p134
      %p136 = scmp.ne.s32.totalorder %s122, %s123
      %p137 = scmp.eq.s32.totalorder %s25, 7
      %p138 = por %p136, %p137
      %p140 = scmp.ne.s32.totalorder %s123, %s139
      %p141 = scmp.eq.s32.totalorder %s25, 0
      %p142 = por %p140, %p141
      %s144 = sadd.s32 %s143, 1
      %p147 = scmp.eq.s32.totalorder %s19, 7
      %p148 = scmp.ne.s32.totalorder %s143, %s145
      %p149 = scmp.eq.s32.totalorder %s19, 0
      %p150 = por %p148, %p149
      %p151 = scmp.ne.s32.totalorder %s143, %s145
      %p152 = scmp.eq.s32.totalorder %s24, 7
      %p153 = por %p151, %p152
      %p154 = scmp.ne.s32.totalorder %s145, %s146
      %p155 = scmp.eq.s32.totalorder %s24, 0
      %p156 = por %p154, %p155
      %p157 = scmp.ne.s32.totalorder %s145, %s146
      %p158 = scmp.eq.s32.totalorder %s25, 7
      %p159 = por %p157, %p158
      %p161 = scmp.ne.s32.totalorder %s146, %s160
      %p162 = scmp.eq.s32.totalorder %s25, 0
      %p163 = por %p161, %p162
      %s164 = ssub.s32 %s26, %s38
      %p165 = scmp.eq.s32.totalorder %s164, 0
      %s167 = sadd.s32 %s166, 1
      %s168 = scalar_select %p165, %s166, %s167
      %p171 = pneg %p165
      %p172 = scmp.eq.s32.totalorder %s19, 7
      %p173 = por %p171, %p172
      %p174 = scmp.ne.s32.totalorder %s166, %s169
      %p175 = scmp.eq.s32.totalorder %s19, 0
      %p176 = por %p174, %p175
      %p177 = scmp.ne.s32.totalorder %s166, %s169
      %p178 = scmp.eq.s32.totalorder %s24, 7
      %p179 = por %p177, %p178
      %p180 = scmp.ne.s32.totalorder %s169, %s170
      %p181 = scmp.eq.s32.totalorder %s24, 0
      %p182 = por %p180, %p181
      %p183 = scmp.ne.s32.totalorder %s169, %s170
      %p184 = scmp.eq.s32.totalorder %s25, 7
      %p185 = por %p183, %p184
      %p187 = scmp.ne.s32.totalorder %s170, %s186
      %p188 = scmp.eq.s32.totalorder %s25, 0
      %p189 = por %p187, %p188
      %s190 = ssub.s32 %s26, %s38
      %s191 = ssub.s32 %s27, %s34
      %s192 = sor.u32 %s190, %s191
      %p193 = scmp.eq.s32.totalorder %s192, 0
      %s195 = sadd.s32 %s194, 1
      %s196 = scalar_select %p193, %s194, %s195
      %p199 = pneg %p193
      %p200 = scmp.eq.s32.totalorder %s19, 7
      %p201 = por %p199, %p200
      %p202 = scmp.ne.s32.totalorder %s194, %s197
      %p203 = scmp.eq.s32.totalorder %s19, 0
      %p204 = por %p202, %p203
      %p205 = scmp.ne.s32.totalorder %s194, %s197
      %p206 = scmp.eq.s32.totalorder %s24, 7
      %p207 = por %p205, %p206
      %p208 = scmp.ne.s32.totalorder %s197, %s198
      %p209 = scmp.eq.s32.totalorder %s24, 0
      %p210 = por %p208, %p209
      %p211 = scmp.ne.s32.totalorder %s197, %s198
      %p212 = scmp.eq.s32.totalorder %s25, 7
      %p213 = por %p211, %p212
      %p215 = scmp.ne.s32.totalorder %s198, %s214
      %p216 = scmp.eq.s32.totalorder %s25, 0
      %p217 = por %p215, %p216
      %p218 = scmp.le.s32.totalorder 1, %s19
      %p219 = scmp.lt.s32.totalorder %s19, 9
      %p220 = pnand %p218, %p219
      %p221 = pneg %p220
      // Predicated region
      $region9: #{tpu_custom_call.1} parent=5 // pred_check
        _
      $region10: #{tpu_custom_call.1} parent=5 // pred_check_branch
        %223 = sbr.rel (%p220) target = $region12
      $region11: #{tpu_custom_call.1} parent=5 // pred_region
        %s224 = ssub.s32 %s19, 1
        // Predicated region
        $region13: #{tpu_custom_call.1} parent=11 // pred_check
          %p225 = pneg %p156
        $region14: #{tpu_custom_call.1} parent=11 // pred_check_branch
          %227 = sbr.rel (%p225) target = $region16
        $region15: #{tpu_custom_call.1} parent=11 // pred_region
          _
        $region16: #{tpu_custom_call.1} parent=11 // pred_fallthru
          _
      $region12: #{tpu_custom_call.1} parent=5 // pred_fallthru
        _
      %p228 = scmp.lt.s32.totalorder %s19, 8
      // Predicated region
      $region17: #{tpu_custom_call.1} parent=5 // pred_check
        %p229 = pneg %p228
      $region18: #{tpu_custom_call.1} parent=5 // pred_check_branch
        %231 = sbr.rel (%p229) target = $region20
      $region19: #{tpu_custom_call.1} parent=5 // pred_region
        // Predicated region
        $region21: #{tpu_custom_call.1} parent=19 // pred_check
          %p232 = pneg %p51
        $region22: #{tpu_custom_call.1} parent=19 // pred_check_branch
          %234 = sbr.rel (%p232) target = $region24
        $region23: #{tpu_custom_call.1} parent=19 // pred_region
          %p235 = scmp.lt.s32.totalorder %s26, 1
          %s236 = scalar_select %p235, %s26, 1
          %s237 = smul.addr %s236, 8
          %s238 = scalar_lea.vmem %s0, %s237
        $region24: #{tpu_custom_call.1} parent=19 // pred_fallthru
          _
        // Predicated region
        $region25: #{tpu_custom_call.1} parent=19 // pred_check
          %p239 = pneg %p77
        $region26: #{tpu_custom_call.1} parent=19 // pred_check_branch
          %241 = sbr.rel (%p239) target = $region28
        $region27: #{tpu_custom_call.1} parent=19 // pred_region
          %p242 = scmp.lt.s32.totalorder %s27, 3
          %s243 = scalar_select %p242, %s27, 3
          %s244 = smul.addr %s243, 12
          %s245 = smul.addr %s244, 4
          %s246 = scalar_lea.vmem %s1, %s245
        $region28: #{tpu_custom_call.1} parent=19 // pred_fallthru
          _
        // Predicated region
        $region29: #{tpu_custom_call.1} parent=19 // pred_check
          %p247 = pneg %p103
        $region30: #{tpu_custom_call.1} parent=19 // pred_check_branch
          %249 = sbr.rel (%p247) target = $region32
        $region31: #{tpu_custom_call.1} parent=19 // pred_region
          %p250 = scmp.lt.s32.totalorder %s27, 3
          %s251 = scalar_select %p250, %s27, 3
          %s252 = smul.addr %s251, 3
          %s253 = scalar_lea.vmem %s2, %s252
        $region32: #{tpu_custom_call.1} parent=19 // pred_fallthru
          _
        // Predicated region
        $region33: #{tpu_custom_call.1} parent=19 // pred_check
          %p254 = pneg %p129
        $region34: #{tpu_custom_call.1} parent=19 // pred_check_branch
          %256 = sbr.rel (%p254) target = $region36
        $region35: #{tpu_custom_call.1} parent=19 // pred_region
          %p257 = scmp.lt.s32.totalorder %s27, 3
          %s258 = scalar_select %p257, %s27, 3
          %s259 = smul.addr %s258, 4
          %s260 = scalar_lea.vmem %s3, %s259
        $region36: #{tpu_custom_call.1} parent=19 // pred_fallthru
          _
      $region20: #{tpu_custom_call.1} parent=5 // pred_fallthru
        _
      %p261 = scmp.le.s32.totalorder 1, %s19
      %p262 = scmp.lt.s32.totalorder %s19, 9
      %p263 = pnand %p261, %p262
      %p264 = pneg %p263
      // Predicated region
      $region37: #{tpu_custom_call.1} parent=5 // pred_check
        _
      $region38: #{tpu_custom_call.1} parent=5 // pred_check_branch
        %266 = sbr.rel (%p263) target = $region40
      $region39: #{tpu_custom_call.1} parent=5 // pred_region
        %s267 = ssub.s32 %s19, 1
        %p268 = scmp.lt.s32.totalorder %s28, 1
        %s269 = scalar_select %p268, %s28, 1
        %s270 = smul.addr %s269, 8
        %s271 = scalar_lea.vmem %s0, %s270
        %p272 = pneg %p57
        %p273 = pneg %p54
        %p274 = scmp.lt.s32.totalorder %s29, 3
        %s275 = scalar_select %p274, %s29, 3
        %s276 = smul.addr %s275, 12
        %s277 = smul.addr %s276, 4
        %s278 = scalar_lea.vmem %s1, %s277
        %p279 = pneg %p83
        %p280 = pneg %p80
        %p281 = scmp.lt.s32.totalorder %s29, 3
        %s282 = scalar_select %p281, %s29, 3
        %s283 = smul.addr %s282, 3
        %s284 = scalar_lea.vmem %s2, %s283
        %p285 = pneg %p109
        %p286 = pneg %p106
        %p287 = scmp.lt.s32.totalorder %s29, 3
        %s288 = scalar_select %p287, %s29, 3
        %s289 = smul.addr %s288, 4
        %s290 = scalar_lea.vmem %s3, %s289
        %p291 = pneg %p135
        %p292 = pneg %p132
        %p293 = pneg %p156
        %p294 = pneg %p153
        %p295 = pneg %p182
        %p296 = pneg %p179
        %s297 = sand.u32 %s169, 1
        %s298 = scalar_lea.sflag [#allocation4], %s297
        %s299 = sand.u32 %s169, 1
        %s300 = smul.addr %s299, 8
        %s301 = scalar_lea.vmem [#allocation3], %s300
        %p302 = pneg %p210
        %p303 = pneg %p207
        %s304 = sand.u32 %s197, 1
        %s305 = scalar_lea.sflag [#allocation6], %s304
        %s306 = sand.u32 %s197, 1
        %s307 = smul.addr %s306, 8
        %s308 = scalar_lea.vmem [#allocation5], %s307
        %p309 = scmp.lt.s32.totalorder %s28, 1
        %s310 = scalar_select %p309, %s28, 1
        %s311 = smul.addr %s310, 8
        %s312 = scalar_lea.vmem %s0, %s311
        %p313 = scmp.lt.s32.totalorder %s29, 3
        %s314 = scalar_select %p313, %s29, 3
        %s315 = smul.addr %s314, 12
        %s316 = smul.addr %s315, 4
        %s317 = scalar_lea.vmem %s1, %s316
        %p318 = scmp.lt.s32.totalorder %s29, 3
        %s319 = scalar_select %p318, %s29, 3
        %s320 = smul.addr %s319, 3
        %s321 = scalar_lea.vmem %s2, %s320
        %p322 = scmp.lt.s32.totalorder %s29, 3
        %s323 = scalar_select %p322, %s29, 3
        %s324 = smul.addr %s323, 4
        %s325 = scalar_lea.vmem %s3, %s324
        %p327 = scmp.eq.s32.totalorder %s29, 0
        // Predicated region
        $region41: #{tpu_custom_call.1} parent=39 // pred_check
          %p328 = pneg %p327
        $region42: #{tpu_custom_call.1} parent=39 // pred_check_branch
          %330 = sbr.rel (%p328) target = $region44
        $region43: #{tpu_custom_call.1} parent=39 // pred_region
          %v331 = vld [vmem:[%s4] sm:$0x1]
          %v333 = vlaneseq
          %v334 = vshrl.u32 %v333, 7
          %v335 = vsub.s32 0, %v334
          %v336 = vrot.slane %v331, %v335
          %vm338 = vcmask 261120
          %339 = vst.msk [vmem:[#allocation2] sm:$0xff] %vm338, %v336
        $region44: #{tpu_custom_call.1} parent=39 // pred_fallthru
          _
        %v340 = vld [vmem:[%s312] sm:$0xff]
        %v341 = vpack.c.bf16 %v340, %v340
        %v342 = vld [vmem:[%s317] sm:$0xf]
        %v343 = vld [vmem:[%s317 + $0x4] sm:$0xf]
        %v344 = vld [vmem:[%s317 + $0x8] sm:$0xf]
        %v345 = vld [vmem:[%s317 + $0xc] sm:$0xf]
        %v346 = vld [vmem:[%s321] sm:$0x1]
        %v348 = vlaneseq
        %v349 = vshrl.u32 %v348, 7
        %v350 = vsub.s32 0, %v349
        %v351 = vrot.slane %v346, %v350
        %v357 = vunpack.c.l.b16 %v342
        %v358 = vunpack.c.l.b16 %v343
        %v359 = vunpack.c.l.b16 %v344
        %v360 = vunpack.c.l.b16 %v345
        %v361 = vpack.c.b16 %v358, %v357
        %v362 = vpack.c.b16 %v360, %v359
        %vm365 = vcmask 261120
        %v367 = vsel %vm365, %v341, 0
        %369 = vmatprep.subr.bf16.mxu0 0
        %370 = vmatpush1.bf16.msra.mxu0 %v361
        %371 = vmatprep.subr.bf16.mxu0 0
        %372 = vmatpush1.bf16.msra.mxu0 %v362
        %373 = vmatprep.subr.bf16.mxu0 0
        %374 = vmatpush1.bf16.msra.mxu0 0
        %375 = vmatprep.subr.bf16.mxu0 0
        %376 = vmatpush1.bf16.msra.mxu0 0
        %377 = vmatprep.subr.bf16.mxu0 0
        %378 = vmatpush1.bf16.msra.mxu0 0
        %379 = vmatprep.subr.bf16.mxu0 0
        %380 = vmatpush1.bf16.msra.mxu0 0
        %381 = vmatprep.subr.bf16.mxu0 0
        %382 = vmatpush1.bf16.msra.mxu0 0
        %383 = vmatprep.subr.bf16.mxu0 0
        %384 = vmatpush1.bf16.msra.mxu0 0
        %385 = vmatprep.subr.bf16.mxu0 0
        %386 = vmatpush1.bf16.msra.mxu0 0
        %387 = vmatprep.subr.bf16.mxu0 0
        %388 = vmatpush1.bf16.msra.mxu0 0
        %389 = vmatprep.subr.bf16.mxu0 0
        %390 = vmatpush1.bf16.msra.mxu0 0
        %391 = vmatprep.subr.bf16.mxu0 0
        %392 = vmatpush1.bf16.msra.mxu0 0
        %393 = vmatprep.subr.bf16.mxu0 0
        %394 = vmatpush1.bf16.msra.mxu0 0
        %395 = vmatprep.subr.bf16.mxu0 0
        %396 = vmatpush1.bf16.msra.mxu0 0
        %397 = vmatprep.subr.bf16.mxu0 0
        %398 = vmatpush1.bf16.msra.mxu0 0
        %399 = vmatprep.subr.bf16.mxu0 0
        %400 = vmatpush1.bf16.msra.mxu0 0
        %401 = vmatprep.mubr.bf16.mxu0 0
        %402 = vmatmul.mubr.bf16.gmra.mrb[0].mxu0 %v367
        %v403 = vpop.f32.mrb[0].mxu0
        %v404 = vadd.f32 %v351, %v403
        %v405 = vpop.f32.mrb[0].mxu0
        %v406 = vpop.f32.mrb[0].mxu0
        %v407 = vpop.f32.mrb[0].mxu0
        %408 = vdwg.mxu0
        %s409 = scalar_lea.vmem %s317, 16
        %v410 = vld [vmem:[%s409] sm:$0xf]
        %v411 = vld [vmem:[%s409 + $0x4] sm:$0xf]
        %v412 = vld [vmem:[%s409 + $0x8] sm:$0xf]
        %v413 = vld [vmem:[%s409 + $0xc] sm:$0xf]
        %s414 = scalar_lea.vmem %s321, 1
        %v415 = vld [vmem:[%s414] sm:$0x1]
        %v417 = vlaneseq
        %v418 = vshrl.u32 %v417, 7
        %v419 = vsub.s32 0, %v418
        %v420 = vrot.slane %v415, %v419
        %v426 = vunpack.c.l.b16 %v410
        %v427 = vunpack.c.l.b16 %v411
        %v428 = vunpack.c.l.b16 %v412
        %v429 = vunpack.c.l.b16 %v413
        %v430 = vpack.c.b16 %v427, %v426
        %v431 = vpack.c.b16 %v429, %v428
        %434 = vmatprep.subr.bf16.mxu0 0
        %435 = vmatpush1.bf16.msra.mxu0 %v430
        %436 = vmatprep.subr.bf16.mxu0 0
        %437 = vmatpush1.bf16.msra.mxu0 %v431
        %438 = vmatprep.subr.bf16.mxu0 0
        %439 = vmatpush1.bf16.msra.mxu0 0
        %440 = vmatprep.subr.bf16.mxu0 0
        %441 = vmatpush1.bf16.msra.mxu0 0
        %442 = vmatprep.subr.bf16.mxu0 0
        %443 = vmatpush1.bf16.msra.mxu0 0
        %444 = vmatprep.subr.bf16.mxu0 0
        %445 = vmatpush1.bf16.msra.mxu0 0
        %446 = vmatprep.subr.bf16.mxu0 0
        %447 = vmatpush1.bf16.msra.mxu0 0
        %448 = vmatprep.subr.bf16.mxu0 0
        %449 = vmatpush1.bf16.msra.mxu0 0
        %450 = vmatprep.subr.bf16.mxu0 0
        %451 = vmatpush1.bf16.msra.mxu0 0
        %452 = vmatprep.subr.bf16.mxu0 0
        %453 = vmatpush1.bf16.msra.mxu0 0
        %454 = vmatprep.subr.bf16.mxu0 0
        %455 = vmatpush1.bf16.msra.mxu0 0
        %456 = vmatprep.subr.bf16.mxu0 0
        %457 = vmatpush1.bf16.msra.mxu0 0
        %458 = vmatprep.subr.bf16.mxu0 0
        %459 = vmatpush1.bf16.msra.mxu0 0
        %460 = vmatprep.subr.bf16.mxu0 0
        %461 = vmatpush1.bf16.msra.mxu0 0
        %462 = vmatprep.subr.bf16.mxu0 0
        %463 = vmatpush1.bf16.msra.mxu0 0
        %464 = vmatprep.subr.bf16.mxu0 0
        %465 = vmatpush1.bf16.msra.mxu0 0
        %466 = vmatprep.mubr.bf16.mxu0 0
        %467 = vmatmul.mubr.bf16.gmra.mrb[0].mxu0 %v367
        %v468 = vpop.f32.mrb[0].mxu0
        %v469 = vadd.f32 %v420, %v468
        %v470 = vpop.f32.mrb[0].mxu0
        %v471 = vpop.f32.mrb[0].mxu0
        %v472 = vpop.f32.mrb[0].mxu0
        %473 = vdwg.mxu0
        %s474 = scalar_lea.vmem %s317, 32
        %v475 = vld [vmem:[%s474] sm:$0xf]
        %v476 = vld [vmem:[%s474 + $0x4] sm:$0xf]
        %v477 = vld [vmem:[%s474 + $0x8] sm:$0xf]
        %v478 = vld [vmem:[%s474 + $0xc] sm:$0xf]
        %s479 = scalar_lea.vmem %s321, 2
        %v480 = vld [vmem:[%s479] sm:$0x1]
        %v482 = vlaneseq
        %v483 = vshrl.u32 %v482, 7
        %v484 = vsub.s32 0, %v483
        %v485 = vrot.slane %v480, %v484
        %v491 = vunpack.c.l.b16 %v475
        %v492 = vunpack.c.l.b16 %v476
        %v493 = vunpack.c.l.b16 %v477
        %v494 = vunpack.c.l.b16 %v478
        %v495 = vpack.c.b16 %v492, %v491
        %v496 = vpack.c.b16 %v494, %v493
        %499 = vmatprep.subr.bf16.mxu0 0
        %500 = vmatpush1.bf16.msra.mxu0 %v495
        %501 = vmatprep.subr.bf16.mxu0 0
        %502 = vmatpush1.bf16.msra.mxu0 %v496
        %503 = vmatprep.subr.bf16.mxu0 0
        %504 = vmatpush1.bf16.msra.mxu0 0
        %505 = vmatprep.subr.bf16.mxu0 0
        %506 = vmatpush1.bf16.msra.mxu0 0
        %507 = vmatprep.subr.bf16.mxu0 0
        %508 = vmatpush1.bf16.msra.mxu0 0
        %509 = vmatprep.subr.bf16.mxu0 0
        %510 = vmatpush1.bf16.msra.mxu0 0
        %511 = vmatprep.subr.bf16.mxu0 0
        %512 = vmatpush1.bf16.msra.mxu0 0
        %513 = vmatprep.subr.bf16.mxu0 0
        %514 = vmatpush1.bf16.msra.mxu0 0
        %515 = vmatprep.subr.bf16.mxu0 0
        %516 = vmatpush1.bf16.msra.mxu0 0
        %517 = vmatprep.subr.bf16.mxu0 0
        %518 = vmatpush1.bf16.msra.mxu0 0
        %519 = vmatprep.subr.bf16.mxu0 0
        %520 = vmatpush1.bf16.msra.mxu0 0
        %521 = vmatprep.subr.bf16.mxu0 0
        %522 = vmatpush1.bf16.msra.mxu0 0
        %523 = vmatprep.subr.bf16.mxu0 0
        %524 = vmatpush1.bf16.msra.mxu0 0
        %525 = vmatprep.subr.bf16.mxu0 0
        %526 = vmatpush1.bf16.msra.mxu0 0
        %527 = vmatprep.subr.bf16.mxu0 0
        %528 = vmatpush1.bf16.msra.mxu0 0
        %529 = vmatprep.subr.bf16.mxu0 0
        %530 = vmatpush1.bf16.msra.mxu0 0
        %531 = vmatprep.mubr.bf16.mxu0 0
        %532 = vmatmul.mubr.bf16.gmra.mrb[0].mxu0 %v367
        %v533 = vpop.f32.mrb[0].mxu0
        %v534 = vadd.f32 %v485, %v533
        %v535 = vpop.f32.mrb[0].mxu0
        %v536 = vpop.f32.mrb[0].mxu0
        %v537 = vpop.f32.mrb[0].mxu0
        %538 = vdwg.mxu0
        %v539 = vpack.c.bf16 %v404, %v404
        %v540 = vpack.c.bf16 %v469, %v469
        %vm541 = vcmask 64512
        %v543 = vsel %vm541, %v539, 0
        %v546 = vsel %vm541, %v540, 0
        %548 = vmatprep.subr.bf16.mxu0 0
        %549 = vmatpush1.bf16.xpose.msra.mxu0 %v546
        %550 = vmatprep.subr.bf16.mxu0 0
        %551 = vmatpush1.bf16.xpose.msra.mxu0 0
        %552 = vmatprep.subr.bf16.mxu0 0
        %553 = vmatpush1.bf16.xpose.msra.mxu0 0
        %554 = vmatprep.subr.bf16.mxu0 0
        %555 = vmatpush1.bf16.xpose.msra.mxu0 0
        %556 = vmatprep.subr.bf16.mxu0 0
        %557 = vmatpush1.bf16.xpose.msra.mxu0 0
        %558 = vmatprep.subr.bf16.mxu0 0
        %559 = vmatpush1.bf16.xpose.msra.mxu0 0
        %560 = vmatprep.subr.bf16.mxu0 0
        %561 = vmatpush1.bf16.xpose.msra.mxu0 0
        %562 = vmatprep.subr.bf16.mxu0 0
        %563 = vmatpush1.bf16.xpose.msra.mxu0 0
        %564 = vmatprep.subr.bf16.mxu0 0
        %565 = vmatpush1.bf16.xpose.msra.mxu0 0
        %566 = vmatprep.subr.bf16.mxu0 0
        %567 = vmatpush1.bf16.xpose.msra.mxu0 0
        %568 = vmatprep.subr.bf16.mxu0 0
        %569 = vmatpush1.bf16.xpose.msra.mxu0 0
        %570 = vmatprep.subr.bf16.mxu0 0
        %571 = vmatpush1.bf16.xpose.msra.mxu0 0
        %572 = vmatprep.subr.bf16.mxu0 0
        %573 = vmatpush1.bf16.xpose.msra.mxu0 0
        %574 = vmatprep.subr.bf16.mxu0 0
        %575 = vmatpush1.bf16.xpose.msra.mxu0 0
        %576 = vmatprep.subr.bf16.mxu0 0
        %577 = vmatpush1.bf16.xpose.msra.mxu0 0
        %578 = vmatprep.subr.bf16.mxu0 0
        %579 = vmatpush1.bf16.xpose.msra.mxu0 0
        %580 = vmatprep.mubr.bf16.mxu0 0
        %581 = vmatmul.mubr.bf16.gmra.mrb[0].mxu0 %v543
        %v582 = vpop.f32.mrb[0].mxu0
        %v583 = vadd.f32 0.0, %v582
        %v584 = vpop.f32.mrb[0].mxu0
        %v585 = vpop.f32.mrb[0].mxu0
        %v586 = vpop.f32.mrb[0].mxu0
        %587 = vdwg.mxu0
        %v588 = vsel %vm541, %v583, -inf
        %589 = vmax.xlane.f32.xlu0 %v588
        %v590 = vpop.xlane.xlu0 %589
        %v591 = vsub.f32 %v583, %v590
        %v592 = vmul.f32 %v591, 1.442695
        %v593 = vpow.pop %v592
        %v594 = vsel %vm541, %v593, 0.0
        %595 = vadd.xlane.f32.xlu0 %v594
        %v596 = vpop.xlane.xlu0 %595
        %v597 = vrcp.pop %v596
        %v598 = vmul.f32 %v593, %v597
        %599 = vst.msk [vmem:[%s308] sm:$0xff] %vm541, %v598
        %v600 = vpack.c.bf16 %v598, %v598
        %v601 = vpack.c.bf16 %v534, %v534
        %v603 = vsel %vm541, %v600, 0
        %vm605 = vcmask 1043456
        %v607 = vsel %vm605, %v601, 0
        %609 = vmatprep.subr.bf16.mxu0 0
        %610 = vmatpush1.bf16.msra.mxu0 %v607
        %611 = vmatprep.subr.bf16.mxu0 0
        %612 = vmatpush1.bf16.msra.mxu0 0
        %613 = vmatprep.subr.bf16.mxu0 0
        %614 = vmatpush1.bf16.msra.mxu0 0
        %615 = vmatprep.subr.bf16.mxu0 0
        %616 = vmatpush1.bf16.msra.mxu0 0
        %617 = vmatprep.subr.bf16.mxu0 0
        %618 = vmatpush1.bf16.msra.mxu0 0
        %619 = vmatprep.subr.bf16.mxu0 0
        %620 = vmatpush1.bf16.msra.mxu0 0
        %621 = vmatprep.subr.bf16.mxu0 0
        %622 = vmatpush1.bf16.msra.mxu0 0
        %623 = vmatprep.subr.bf16.mxu0 0
        %624 = vmatpush1.bf16.msra.mxu0 0
        %625 = vmatprep.subr.bf16.mxu0 0
        %626 = vmatpush1.bf16.msra.mxu0 0
        %627 = vmatprep.subr.bf16.mxu0 0
        %628 = vmatpush1.bf16.msra.mxu0 0
        %629 = vmatprep.subr.bf16.mxu0 0
        %630 = vmatpush1.bf16.msra.mxu0 0
        %631 = vmatprep.subr.bf16.mxu0 0
        %632 = vmatpush1.bf16.msra.mxu0 0
        %633 = vmatprep.subr.bf16.mxu0 0
        %634 = vmatpush1.bf16.msra.mxu0 0
        %635 = vmatprep.subr.bf16.mxu0 0
        %636 = vmatpush1.bf16.msra.mxu0 0
        %637 = vmatprep.subr.bf16.mxu0 0
        %638 = vmatpush1.bf16.msra.mxu0 0
        %639 = vmatprep.subr.bf16.mxu0 0
        %640 = vmatpush1.bf16.msra.mxu0 0
        %641 = vmatprep.mubr.bf16.mxu0 0
        %642 = vmatmul.mubr.bf16.gmra.mrb[0].mxu0 %v603
        %v643 = vpop.f32.mrb[0].mxu0
        %v644 = vadd.f32 0.0, %v643
        %v645 = vpop.f32.mrb[0].mxu0
        %v646 = vpop.f32.mrb[0].mxu0
        %v647 = vpop.f32.mrb[0].mxu0
        %648 = vdwg.mxu0
        %v649 = vld [vmem:[#allocation2] sm:$0xff]
        %v650 = vpack.c.bf16 %v644, %v644
        %v651 = vld [vmem:[%s325] sm:$0xf]
        %v653 = vsel %vm541, %v650, 0
        %v656 = vsel %vm605, %v651, 0
        %658 = vmatprep.subr.bf16.mxu0 0
        %659 = vmatpush1.bf16.msra.mxu0 %v656
        %660 = vmatprep.subr.bf16.mxu0 0
        %661 = vmatpush1.bf16.msra.mxu0 0
        %662 = vmatprep.subr.bf16.mxu0 0
        %663 = vmatpush1.bf16.msra.mxu0 0
        %664 = vmatprep.subr.bf16.mxu0 0
        %665 = vmatpush1.bf16.msra.mxu0 0
        %666 = vmatprep.subr.bf16.mxu0 0
        %667 = vmatpush1.bf16.msra.mxu0 0
        %668 = vmatprep.subr.bf16.mxu0 0
        %669 = vmatpush1.bf16.msra.mxu0 0
        %670 = vmatprep.subr.bf16.mxu0 0
        %671 = vmatpush1.bf16.msra.mxu0 0
        %672 = vmatprep.subr.bf16.mxu0 0
        %673 = vmatpush1.bf16.msra.mxu0 0
        %674 = vmatprep.subr.bf16.mxu0 0
        %675 = vmatpush1.bf16.msra.mxu0 0
        %676 = vmatprep.subr.bf16.mxu0 0
        %677 = vmatpush1.bf16.msra.mxu0 0
        %678 = vmatprep.subr.bf16.mxu0 0
        %679 = vmatpush1.bf16.msra.mxu0 0
        %680 = vmatprep.subr.bf16.mxu0 0
        %681 = vmatpush1.bf16.msra.mxu0 0
        %682 = vmatprep.subr.bf16.mxu0 0
        %683 = vmatpush1.bf16.msra.mxu0 0
        %684 = vmatprep.subr.bf16.mxu0 0
        %685 = vmatpush1.bf16.msra.mxu0 0
        %686 = vmatprep.subr.bf16.mxu0 0
        %687 = vmatpush1.bf16.msra.mxu0 0
        %688 = vmatprep.subr.bf16.mxu0 0
        %689 = vmatpush1.bf16.msra.mxu0 0
        %690 = vmatprep.mubr.bf16.mxu0 0
        %691 = vmatmul.mubr.bf16.gmra.mrb[0].mxu0 %v653
        %v692 = vpop.f32.mrb[0].mxu0
        %v693 = vadd.f32 0.0, %v692
        %v694 = vpop.f32.mrb[0].mxu0
        %v695 = vpop.f32.mrb[0].mxu0
        %v696 = vpop.f32.mrb[0].mxu0
        %697 = vdwg.mxu0
        %v698 = vadd.f32 %v649, %v693
        %699 = vst.msk [vmem:[#allocation2] sm:$0xff] %vm365, %v698
        %p700 = scmp.eq.s32.totalorder %s29, 3
        // Predicated region
        $region45: #{tpu_custom_call.1} parent=39 // pred_check
          %p701 = pneg %p700
        $region46: #{tpu_custom_call.1} parent=39 // pred_check_branch
          %703 = sbr.rel (%p701) target = $region48
        $region47: #{tpu_custom_call.1} parent=39 // pred_region
          %v704 = vld [vmem:[#allocation2] sm:$0xff]
          %705 = vst.msk [vmem:[%s301] sm:$0xff] %vm365, %v704
        $region48: #{tpu_custom_call.1} parent=39 // pred_fallthru
          _
        %s706 = sand.u32 %s169, 1
        %s707 = scalar_lea.sflag [#allocation4], %s706
        %s708 = sand.u32 %s169, 1
        %s709 = smul.addr %s708, 8
        %s710 = scalar_lea.vmem [#allocation3], %s709
        %s711 = sand.u32 %s197, 1
        %s712 = scalar_lea.sflag [#allocation6], %s711
        %s713 = sand.u32 %s197, 1
        %s714 = smul.addr %s713, 8
        %s715 = scalar_lea.vmem [#allocation5], %s714
        // Predicated region
        $region49: #{tpu_custom_call.1} parent=39 // pred_check
          %p716 = pneg %p179
        $region50: #{tpu_custom_call.1} parent=39 // pred_check_branch
          %718 = sbr.rel (%p716) target = $region52
        $region51: #{tpu_custom_call.1} parent=39 // pred_region
          %s720 = ssub.s32 128, 128
          %721 = vsyncadd %s707, %s720
          %s722 = smul.addr %s28, 128
          %s723 = scalar_lea.hbm %s5, %s722
          %s725 = sshll.u32 %s710, 4
          %s726 = int_to_ptr.vmem [resolvable:$true] %s725
          %728 = dma.vmem_to_hbm [thread:$0]  %s726, 128, %s723, %s707
        $region52: #{tpu_custom_call.1} parent=39 // pred_fallthru
          _
        // Predicated region
        $region53: #{tpu_custom_call.1} parent=39 // pred_check
          %p729 = pneg %p207
        $region54: #{tpu_custom_call.1} parent=39 // pred_check_branch
          %731 = sbr.rel (%p729) target = $region56
        $region55: #{tpu_custom_call.1} parent=39 // pred_region
          %s733 = ssub.s32 128, 128
          %734 = vsyncadd %s712, %s733
          %s735 = smul.addr %s28, 4
          %s736 = sadd.s32 %s29, %s735
          %s737 = smul.addr %s736, 128
          %s738 = scalar_lea.hbm %s6, %s737
          %s740 = sshll.u32 %s715, 4
          %s741 = int_to_ptr.vmem [resolvable:$true] %s740
          %743 = dma.vmem_to_hbm [thread:$0]  %s741, 128, %s738, %s712
        $region56: #{tpu_custom_call.1} parent=39 // pred_fallthru
          _
      $region40: #{tpu_custom_call.1} parent=5 // pred_fallthru
        _
      %p744 = scmp.le.s32.totalorder 2, %s19
      // Predicated region
      $region57: #{tpu_custom_call.1} parent=5 // pred_check
        %p745 = pneg %p744
      $region58: #{tpu_custom_call.1} parent=5 // pred_check_branch
        %747 = sbr.rel (%p745) target = $region60
      $region59: #{tpu_custom_call.1} parent=5 // pred_region
        %s748 = ssub.s32 %s19, 2
        // Predicated region
        $region61: #{tpu_custom_call.1} parent=59 // pred_check
          %p749 = pneg %p185
        $region62: #{tpu_custom_call.1} parent=59 // pred_check_branch
          %751 = sbr.rel (%p749) target = $region64
        $region63: #{tpu_custom_call.1} parent=59 // pred_region
          %s752 = sand.u32 %s170, 1
          %s753 = scalar_lea.sflag [#allocation4], %s752
          %s754 = sand.u32 %s170, 1
          %s755 = smul.addr %s754, 8
          %s756 = scalar_lea.vmem [#allocation3], %s755
          %757 = dma.done %s753, 128
        $region64: #{tpu_custom_call.1} parent=59 // pred_fallthru
          _
        // Predicated region
        $region65: #{tpu_custom_call.1} parent=59 // pred_check
          %p758 = pneg %p213
        $region66: #{tpu_custom_call.1} parent=59 // pred_check_branch
          %760 = sbr.rel (%p758) target = $region68
        $region67: #{tpu_custom_call.1} parent=59 // pred_region
          %s761 = sand.u32 %s198, 1
          %s762 = scalar_lea.sflag [#allocation6], %s761
          %s763 = sand.u32 %s198, 1
          %s764 = smul.addr %s763, 8
          %s765 = scalar_lea.vmem [#allocation5], %s764
          %766 = dma.done %s762, 128
        $region68: #{tpu_custom_call.1} parent=59 // pred_fallthru
          _
      $region60: #{tpu_custom_call.1} parent=5 // pred_fallthru
        _
    $region6: #{tpu_custom_call.1} parent=1 // loop_footer
      %s23 = sadd.s32 1, %s19
    $region7: #{tpu_custom_call.1} parent=1 // loop_footer_branch
      %18 = sbr.rel target = $region3
    $region8: #{tpu_custom_call.1} parent=1 // loop_exit
      _
    %767 = vsyncpa [#allocation4], 1
    %s768 = scalar_lea.sflag [#allocation4], 1
    %769 = vsyncpa %s768, 1
    %770 = vsyncpa [#allocation6], 1
    %s771 = scalar_lea.sflag [#allocation6], 1
    %772 = vsyncpa %s771, 1

</llo_original>
